<compile_context>
chip_gen: v5e
topology: v5e:2x2
jax: 0.10.0
libtpu: 0.0.40
codegen_flags: <defaults>
</compile_context>

<pallas_src>
import functools

import numpy as np
import jax
import jax.numpy as jnp
from jax.experimental import pallas as pl
from jax.experimental.pallas import tpu as pltpu


def _hflip_rows_kernel(x_ref, o_ref, *, w):
    """Reverse every aligned group of `w` lanes of the (rows_blk, C) block.

    The wrapper packs C // w consecutive image rows back-to-back on the lane
    axis (C is a multiple of w), so reversing each aligned w-wide lane group
    horizontally flips every image row.

    The reverse is a log2(w)-step butterfly: after processing the bits
    d = 1, 2, ..., w/2 we have out[i] = x[i XOR (w-1)], i.e. a reverse within
    each aligned w-group.  Each step exchanges lanes at distance d using two
    lane rotations + a select.  Rolling a (1, C) lane-index iota alongside the
    data makes the step independent of the rotation direction convention and
    keeps the mask arithmetic off the full-size block.
    """
    x = x_ref[...]                                   # (rows_blk, C), native dtype
    c = x.shape[-1]
    lane = jax.lax.broadcasted_iota(jnp.int32, (1, c), dimension=1)
    d = 1
    while d < w:
        want = lane ^ d                              # source lane we need: i ^ d
        r_a = pltpu.roll(x, d, axis=1)               # one rotation direction
        r_b = pltpu.roll(x, c - d, axis=1)           # the other direction
        src_a = pltpu.roll(lane, d, axis=1)          # source lane of r_a, per lane
        x = jnp.where(src_a == want, r_a, r_b)       # pick whichever came from i^d
        d *= 2
    o_ref[...] = x


def hflip_pallas(img):
    """Horizontal flip (reverse the last axis) of an [..., H, W] array."""
    assert img.ndim >= 2, "expected [..., H, W]"
    orig_shape = img.shape
    W = int(orig_shape[-1])

    if W & (W - 1) != 0:
        # TODO(synk): butterfly reverse needs power-of-two W; non-pow2 widths
        # fall back to a plain XLA flip (still exact, just not the Pallas path).
        return jnp.flip(img, axis=-1)

    rows = int(np.prod(orig_shape[:-1]))             # all leading dims * H
    itemsize = jnp.dtype(img.dtype).itemsize

    # Lane-dense packing: put G consecutive image rows side by side on the lane
    # axis so the last dim is ~512 wide instead of W (which may be < 128 and
    # would force masked vst partial stores).  Pure contiguous reshape, no data
    # movement outside the kernel.
    target_lanes = 512
    G = 1
    for g in range(max(1, target_lanes // W), 0, -1):
        if rows % g == 0:
            G = g
            break
    C = G * W
    R = rows // G

    # Rows per block: ~2 MiB tiles; TR is either the full extent or a multiple
    # of 8 (sublane constraint).  Double-buffered in+out stays well under the
    # scoped-VMEM limit requested below on v5e/v6e/v7x.
    cap = max(1, (2 * 1024 * 1024) // (C * itemsize))
    cap = max(8, (cap // 8) * 8)
    TR = min(R, cap)

    x = img.reshape(R, C)
    out = pl.pallas_call(
        functools.partial(_hflip_rows_kernel, w=W),
        out_shape=jax.ShapeDtypeStruct((R, C), img.dtype),
        grid_spec=pltpu.PrefetchScalarGridSpec(
            num_scalar_prefetch=0,
            grid=(pl.cdiv(R, TR),),
            in_specs=[pl.BlockSpec((TR, C), lambda i: (i, 0))],
            out_specs=pl.BlockSpec((TR, C), lambda i: (i, 0)),
        ),
        compiler_params=pltpu.CompilerParams(
            dimension_semantics=("parallel",),
            vmem_limit_bytes=32 * 1024 * 1024,
        ),
    )(x)
    return out.reshape(orig_shape)


def random_horizontal_flip_with_res(img, status, p=0.5, key=None):
    """JAX/Pallas port of RandomHorizontalFlipWithRes.forward.

    `status` must be a Python bool (or None), matching how the PyTorch module
    is used; the flip decision is made on the host, so the identity case does
    no device work at all and the flip case runs a flip-only kernel.
    Returns (maybe_flipped_img, status).
    """
    if status is not None:
        if status == True:  # noqa: E712  (mirrors the original module exactly)
            return hflip_pallas(img), status
        return img, status

    # status is None: host-side random decision, like `torch.rand(1) < p`.
    # NOTE: like the original module, this control flow is host-side and is
    # not meant to be traced under jax.jit.
    if key is None:
        key = jax.random.PRNGKey(0)
    status = bool(jax.random.uniform(key, ()) < p)
    if status:
        return hflip_pallas(img), status
    return img, status


if __name__ == "__main__":
    key = jax.random.PRNGKey(0)
    k_img, k_big, k_rand = jax.random.split(key, 3)

    # NCHW input: batch=2, channels=4, spatial=16x16 (W=16 < 128 lanes,
    # exercising the lane-dense row packing).
    img = jax.random.normal(k_img, (2, 4, 16, 16), dtype=jnp.float32)
    ref_flip = jnp.flip(img, axis=-1)

    # Case 1: status == True -> must equal hflip(img)
    out_t, st_t = random_horizontal_flip_with_res(img, True)
    out_t = jax.block_until_ready(out_t)
    assert st_t is True
    np.testing.assert_array_equal(np.asarray(out_t), np.asarray(ref_flip))

    # Case 2: status == False -> identity (no device work)
    out_f, st_f = random_horizontal_flip_with_res(img, False)
    out_f = jax.block_until_ready(out_f)
    assert st_f is False
    np.testing.assert_array_equal(np.asarray(out_f), np.asarray(img))

    # Case 3: status is None -> host random decision with prob p
    out_r, st_r = random_horizontal_flip_with_res(img, None, p=0.5, key=k_rand)
    out_r = jax.block_until_ready(out_r)
    expected = ref_flip if st_r else img
    np.testing.assert_array_equal(np.asarray(out_r), np.asarray(expected))

    # Larger batch that spans multiple grid blocks (exercises the tiling path
    # and a W that already fills the lane axis).
    big = jax.random.normal(k_big, (8, 3, 256, 256), dtype=jnp.float32)
    out_big = jax.block_until_ready(hflip_pallas(big))
    np.testing.assert_array_equal(np.asarray(out_big),
                                  np.asarray(jnp.flip(big, axis=-1)))

    print("KERNEL_OK")
</pallas_src>

<mosaic_0001>
module attributes {stable_mosaic.version = 11 : i64} {
  func.func @_hflip_rows_kernel(%arg0: i32, %arg1: memref<4x512xf32, #tpu.memory_space<vmem>>, %arg2: memref<4x512xf32, #tpu.memory_space<vmem>>) attributes {dimension_semantics = [#tpu.dimension_semantics<parallel>], iteration_bounds = array<i64: 1>, scalar_prefetch = 0 : i64, scratch_operands = 0 : i64, tpu.core_type = #tpu.core_type<tc>, window_params = [{transform_indices = @transform_0, window_bounds = array<i64: 4, 512>}, {transform_indices = @transform_1, window_bounds = array<i64: 4, 512>}]} {
    %c0 = arith.constant 0 : index
    %c0_0 = arith.constant 0 : index
    %0 = vector.load %arg1[%c0, %c0_0] : memref<4x512xf32, #tpu.memory_space<vmem>>, vector<4x512xf32>
    %1 = tpu.iota {dimensions = array<i32: 1>} : vector<1x512xi32>
    %c1_i32 = arith.constant 1 : i32
    %2 = vector.broadcast %c1_i32 : i32 to vector<1x512xi32>
    %3 = arith.xori %1, %2 : vector<1x512xi32>
    %c1_i32_1 = arith.constant 1 : i32
    %4 = tpu.dynamic_rotate %0 by %c1_i32_1 dim 1 : vector<4x512xf32>, i32 -> vector<4x512xf32>
    %c511_i32 = arith.constant 511 : i32
    %5 = tpu.dynamic_rotate %0 by %c511_i32 dim 1 : vector<4x512xf32>, i32 -> vector<4x512xf32>
    %c1_i32_2 = arith.constant 1 : i32
    %6 = tpu.dynamic_rotate %1 by %c1_i32_2 dim 1 : vector<1x512xi32>, i32 -> vector<1x512xi32>
    %7 = arith.cmpi eq, %6, %3 : vector<1x512xi32>
    %8 = vector.shape_cast %7 : vector<1x512xi1> to vector<1x512xi1>
    %9 = vector.broadcast %8 : vector<1x512xi1> to vector<4x512xi1>
    %10 = arith.select %9, %4, %5 : vector<4x512xi1>, vector<4x512xf32>
    %c2_i32 = arith.constant 2 : i32
    %11 = vector.broadcast %c2_i32 : i32 to vector<1x512xi32>
    %12 = arith.xori %1, %11 : vector<1x512xi32>
    %c2_i32_3 = arith.constant 2 : i32
    %13 = tpu.dynamic_rotate %10 by %c2_i32_3 dim 1 : vector<4x512xf32>, i32 -> vector<4x512xf32>
    %c510_i32 = arith.constant 510 : i32
    %14 = tpu.dynamic_rotate %10 by %c510_i32 dim 1 : vector<4x512xf32>, i32 -> vector<4x512xf32>
    %c2_i32_4 = arith.constant 2 : i32
    %15 = tpu.dynamic_rotate %1 by %c2_i32_4 dim 1 : vector<1x512xi32>, i32 -> vector<1x512xi32>
    %16 = arith.cmpi eq, %15, %12 : vector<1x512xi32>
    %17 = vector.shape_cast %16 : vector<1x512xi1> to vector<1x512xi1>
    %18 = vector.broadcast %17 : vector<1x512xi1> to vector<4x512xi1>
    %19 = arith.select %18, %13, %14 : vector<4x512xi1>, vector<4x512xf32>
    %c4_i32 = arith.constant 4 : i32
    %20 = vector.broadcast %c4_i32 : i32 to vector<1x512xi32>
    %21 = arith.xori %1, %20 : vector<1x512xi32>
    %c4_i32_5 = arith.constant 4 : i32
    %22 = tpu.dynamic_rotate %19 by %c4_i32_5 dim 1 : vector<4x512xf32>, i32 -> vector<4x512xf32>
    %c508_i32 = arith.constant 508 : i32
    %23 = tpu.dynamic_rotate %19 by %c508_i32 dim 1 : vector<4x512xf32>, i32 -> vector<4x512xf32>
    %c4_i32_6 = arith.constant 4 : i32
    %24 = tpu.dynamic_rotate %1 by %c4_i32_6 dim 1 : vector<1x512xi32>, i32 -> vector<1x512xi32>
    %25 = arith.cmpi eq, %24, %21 : vector<1x512xi32>
    %26 = vector.shape_cast %25 : vector<1x512xi1> to vector<1x512xi1>
    %27 = vector.broadcast %26 : vector<1x512xi1> to vector<4x512xi1>
    %28 = arith.select %27, %22, %23 : vector<4x512xi1>, vector<4x512xf32>
    %c8_i32 = arith.constant 8 : i32
    %29 = vector.broadcast %c8_i32 : i32 to vector<1x512xi32>
    %30 = arith.xori %1, %29 : vector<1x512xi32>
    %c8_i32_7 = arith.constant 8 : i32
    %31 = tpu.dynamic_rotate %28 by %c8_i32_7 dim 1 : vector<4x512xf32>, i32 -> vector<4x512xf32>
    %c504_i32 = arith.constant 504 : i32
    %32 = tpu.dynamic_rotate %28 by %c504_i32 dim 1 : vector<4x512xf32>, i32 -> vector<4x512xf32>
    %c8_i32_8 = arith.constant 8 : i32
    %33 = tpu.dynamic_rotate %1 by %c8_i32_8 dim 1 : vector<1x512xi32>, i32 -> vector<1x512xi32>
    %34 = arith.cmpi eq, %33, %30 : vector<1x512xi32>
    %35 = vector.shape_cast %34 : vector<1x512xi1> to vector<1x512xi1>
    %36 = vector.broadcast %35 : vector<1x512xi1> to vector<4x512xi1>
    %37 = arith.select %36, %31, %32 : vector<4x512xi1>, vector<4x512xf32>
    %c0_9 = arith.constant 0 : index
    %c0_10 = arith.constant 0 : index
    %38 = vector.load %arg2[%c0_9, %c0_10] : memref<4x512xf32, #tpu.memory_space<vmem>>, vector<4x512xf32>
    tpu.vector_store %arg2[%c0_9, %c0_10], %37 {strides = array<i32>} : memref<4x512xf32, #tpu.memory_space<vmem>>, vector<4x512xf32>,
    return
  }
  func.func @transform_0(%arg0: i32) -> (i32, i32) {
    %c0_i32 = arith.constant 0 : i32
    %c0_i32_0 = arith.constant 0 : i32
    return %arg0, %c0_i32 : i32, i32
  }
  func.func @transform_1(%arg0: i32) -> (i32, i32) {
    %c0_i32 = arith.constant 0 : i32
    %c0_i32_0 = arith.constant 0 : i32
    return %arg0, %c0_i32 : i32, i32
  }
}

</mosaic_0001>

<llo_original>
// kernel: tpu_custom_call.1
$region0: #{tpu_custom_call.1}
  #allocation0 [shape = 'u32[]', space=smem, size = 0x4, offset = 0x4, fixed_abs, tag = 'smem constant byte address 0x4 - core index']
  #allocation1 [shape = 'u32[72,128]{1,0:T(1,128)}', space=vmem, size = 0x9000, scoped, tag = 'internal scratch']
  %s0 = inlined_call_operand.hbm [shape: f32[4,512], index: 0, kind: input, shape index: {}]
  %s1 = inlined_call_operand.hbm [shape: f32[4,512], index: 1, kind: output, shape index: {}]
  %s2 = sld [smem:[#allocation0]]
  $region18: #{tpu_custom_call.1} parent=0
    _
  %s4 = ssub.s32 1, %s2
  %s5 = scalar_select 0, %s4, %s2
  $region1: #{tpu_custom_call.1} parent=0
    #allocation2 [shape = 'u8[8192]{0}', space=vmem, size = 0x2000, scoped, tag = 'input window, operand 0, single buffered']
    #allocation3 [shape = 's32[1]{0}', space=sflag, size = 0x4, scoped, tag = 'scoped memory for tpu_custom_call.1']
    #allocation4 [shape = 's32[1]{0}', space=sflag, size = 0x4, scoped, tag = 'scoped memory for tpu_custom_call.1']
    #allocation5 [shape = 'u8[8192]{0}', space=vmem, size = 0x2000, scoped, tag = 'output window, operand 0, single buffered']
    %6 = vsyncpa [#allocation3], 0
    %7 = vsyncpa [#allocation4], 0
    // Predicated region
    $region2: #{tpu_custom_call.1} parent=1 // pred_check
      _
    $region3: #{tpu_custom_call.1} parent=1 // pred_check_branch
      %9 = sbr.rel (0) target = $region5
    $region4: #{tpu_custom_call.1} parent=1 // pred_region
      %11 = vsyncadd [#allocation3], 0
      %s13 = sshll.u32 %s0, 4
      %s14 = int_to_ptr.hbm [resolvable:$true] %s13
      %s15 = sshll.u32 [#allocation2], 4
      %s16 = int_to_ptr.vmem [resolvable:$true] %s15
      %18 = dma.hbm_to_vmem [thread:$0]  %s14, 256, %s16, [#allocation3]
    $region5: #{tpu_custom_call.1} parent=1 // pred_fallthru
      _
    // Predicated region
    $region6: #{tpu_custom_call.1} parent=1 // pred_check
      _
    $region7: #{tpu_custom_call.1} parent=1 // pred_check_branch
      %20 = sbr.rel (0) target = $region9
    $region8: #{tpu_custom_call.1} parent=1 // pred_region
      %22 = dma.done [#allocation3], 256
    $region9: #{tpu_custom_call.1} parent=1 // pred_fallthru
      _
    %v23 = vld [vmem:[#allocation2] sm:$0xff]
    %v24 = vld [vmem:[#allocation2 + $0x8] sm:$0xff]
    %v25 = vlaneseq
    %v26 = vand.u32 %v25, 127
    %v27 = vadd.s32 %v26, 128
    %v28 = vadd.s32 %v26, 256
    %v29 = vadd.s32 %v26, 384
    %v30 = vxor.u32 %v26, 1
    %v31 = vxor.u32 %v27, 1
    %v32 = vxor.u32 %v28, 1
    %v33 = vxor.u32 %v29, 1
    %36 = vst [vmem:[#allocation1] ss:$2 sm:$0xff] %v23
    %s37 = scalar_lea.vmem [#allocation1], 16
    %38 = vst [vmem:[%s37] ss:$2 sm:$0xff] %v24
    %v39 = vld.sshfl [vmem:[#allocation1] sm:$0xff pattern:$0x75316420]
    %v40 = vld.sshfl [vmem:[#allocation1 + $0x8] sm:$0xff pattern:$0x75316420]
    %v41 = vld.sshfl [vmem:[#allocation1 + $0x10] sm:$0xff pattern:$0x75316420]
    %v42 = vld.sshfl [vmem:[#allocation1 + $0x18] sm:$0xff pattern:$0x75316420]
    %47 = vrot.lane.b32.xlu0 %v39, 1
    %v48 = vpop.permute.xlu0 %47
    %49 = vrot.lane.b32.xlu0 %v40, 1
    %v50 = vpop.permute.xlu0 %49
    %51 = vrot.lane.b32.xlu0 %v41, 1
    %v52 = vpop.permute.xlu0 %51
    %53 = vrot.lane.b32.xlu0 %v42, 1
    %v54 = vpop.permute.xlu0 %53
    %vm55 = vcmp.lt.s32.totalorder %v26, 1
    %v56 = vsel %vm55, %v52, %v54
    %v57 = vsel %vm55, %v50, %v52
    %v58 = vsel %vm55, %v48, %v50
    %v59 = vsel %vm55, %v54, %v48
    %60 = vst [vmem:[#allocation1] ss:$2 sm:$0xff] %v23
    %s61 = scalar_lea.vmem [#allocation1], 16
    %62 = vst [vmem:[%s61] ss:$2 sm:$0xff] %v24
    %v63 = vld.sshfl [vmem:[#allocation1] sm:$0xff pattern:$0x75316420]
    %v64 = vld.sshfl [vmem:[#allocation1 + $0x8] sm:$0xff pattern:$0x75316420]
    %v65 = vld.sshfl [vmem:[#allocation1 + $0x10] sm:$0xff pattern:$0x75316420]
    %v66 = vld.sshfl [vmem:[#allocation1 + $0x18] sm:$0xff pattern:$0x75316420]
    %71 = vrot.lane.b32.xlu0 %v63, 127
    %v72 = vpop.permute.xlu0 %71
    %73 = vrot.lane.b32.xlu0 %v64, 127
    %v74 = vpop.permute.xlu0 %73
    %75 = vrot.lane.b32.xlu0 %v65, 127
    %v76 = vpop.permute.xlu0 %75
    %77 = vrot.lane.b32.xlu0 %v66, 127
    %v78 = vpop.permute.xlu0 %77
    %vm79 = vcmp.lt.s32.totalorder %v26, 127
    %v80 = vsel %vm79, %v76, %v78
    %v81 = vsel %vm79, %v74, %v76
    %v82 = vsel %vm79, %v72, %v74
    %v83 = vsel %vm79, %v78, %v72
    %84 = vrot.lane.b32.xlu0 %v26, 1
    %v85 = vpop.permute.xlu0 %84
    %86 = vrot.lane.b32.xlu0 %v27, 1
    %v87 = vpop.permute.xlu0 %86
    %88 = vrot.lane.b32.xlu0 %v28, 1
    %v89 = vpop.permute.xlu0 %88
    %90 = vrot.lane.b32.xlu0 %v29, 1
    %v91 = vpop.permute.xlu0 %90
    %v92 = vsel %vm55, %v89, %v91
    %v93 = vsel %vm55, %v87, %v89
    %v94 = vsel %vm55, %v85, %v87
    %v95 = vsel %vm55, %v91, %v85
    %vm96 = vcmp.eq.s32.totalorder %v95, %v30
    %vm97 = vcmp.eq.s32.totalorder %v94, %v31
    %vm98 = vcmp.eq.s32.totalorder %v93, %v32
    %vm99 = vcmp.eq.s32.totalorder %v92, %v33
    %v100 = vsel %vm96, 1, 0
    %v101 = vsel %vm97, 1, 0
    %v102 = vsel %vm98, 1, 0
    %v103 = vsel %vm99, 1, 0
    %v104 = vperm.slane %v100, 0
    %v105 = vperm.slane %v101, 0
    %v106 = vperm.slane %v102, 0
    %v107 = vperm.slane %v103, 0
    %vm108 = vcmp.eq.s32.totalorder %v104, 1
    %vm109 = vcmp.eq.s32.totalorder %v105, 1
    %vm110 = vcmp.eq.s32.totalorder %v106, 1
    %vm111 = vcmp.eq.s32.totalorder %v107, 1
    %v112 = vsel %vm108, %v59, %v82
    %v113 = vsel %vm109, %v58, %v81
    %v114 = vsel %vm110, %v57, %v80
    %v115 = vsel %vm111, %v56, %v83
    %v116 = vxor.u32 %v26, 2
    %v117 = vxor.u32 %v27, 2
    %v118 = vxor.u32 %v28, 2
    %v119 = vxor.u32 %v29, 2
    %120 = vrot.lane.b32.xlu0 %v112, 2
    %v121 = vpop.permute.xlu0 %120
    %122 = vrot.lane.b32.xlu0 %v113, 2
    %v123 = vpop.permute.xlu0 %122
    %124 = vrot.lane.b32.xlu0 %v114, 2
    %v125 = vpop.permute.xlu0 %124
    %126 = vrot.lane.b32.xlu0 %v115, 2
    %v127 = vpop.permute.xlu0 %126
    %vm128 = vcmp.lt.s32.totalorder %v26, 2
    %v129 = vsel %vm128, %v125, %v127
    %v130 = vsel %vm128, %v123, %v125
    %v131 = vsel %vm128, %v121, %v123
    %v132 = vsel %vm128, %v127, %v121
    %133 = vrot.lane.b32.xlu0 %v112, 126
    %v134 = vpop.permute.xlu0 %133
    %135 = vrot.lane.b32.xlu0 %v113, 126
    %v136 = vpop.permute.xlu0 %135
    %137 = vrot.lane.b32.xlu0 %v114, 126
    %v138 = vpop.permute.xlu0 %137
    %139 = vrot.lane.b32.xlu0 %v115, 126
    %v140 = vpop.permute.xlu0 %139
    %vm141 = vcmp.lt.s32.totalorder %v26, 126
    %v142 = vsel %vm141, %v138, %v140
    %v143 = vsel %vm141, %v136, %v138
    %v144 = vsel %vm141, %v134, %v136
    %v145 = vsel %vm141, %v140, %v134
    %146 = vrot.lane.b32.xlu0 %v26, 2
    %v147 = vpop.permute.xlu0 %146
    %148 = vrot.lane.b32.xlu0 %v27, 2
    %v149 = vpop.permute.xlu0 %148
    %150 = vrot.lane.b32.xlu0 %v28, 2
    %v151 = vpop.permute.xlu0 %150
    %152 = vrot.lane.b32.xlu0 %v29, 2
    %v153 = vpop.permute.xlu0 %152
    %v154 = vsel %vm128, %v151, %v153
    %v155 = vsel %vm128, %v149, %v151
    %v156 = vsel %vm128, %v147, %v149
    %v157 = vsel %vm128, %v153, %v147
    %vm158 = vcmp.eq.s32.totalorder %v157, %v116
    %vm159 = vcmp.eq.s32.totalorder %v156, %v117
    %vm160 = vcmp.eq.s32.totalorder %v155, %v118
    %vm161 = vcmp.eq.s32.totalorder %v154, %v119
    %v162 = vsel %vm158, 1, 0
    %v163 = vsel %vm159, 1, 0
    %v164 = vsel %vm160, 1, 0
    %v165 = vsel %vm161, 1, 0
    %v166 = vperm.slane %v162, 0
    %v167 = vperm.slane %v163, 0
    %v168 = vperm.slane %v164, 0
    %v169 = vperm.slane %v165, 0
    %vm170 = vcmp.eq.s32.totalorder %v166, 1
    %vm171 = vcmp.eq.s32.totalorder %v167, 1
    %vm172 = vcmp.eq.s32.totalorder %v168, 1
    %vm173 = vcmp.eq.s32.totalorder %v169, 1
    %v174 = vsel %vm170, %v132, %v144
    %v175 = vsel %vm171, %v131, %v143
    %v176 = vsel %vm172, %v130, %v142
    %v177 = vsel %vm173, %v129, %v145
    %v178 = vxor.u32 %v26, 4
    %v179 = vxor.u32 %v27, 4
    %v180 = vxor.u32 %v28, 4
    %v181 = vxor.u32 %v29, 4
    %182 = vrot.lane.b32.xlu0 %v174, 4
    %v183 = vpop.permute.xlu0 %182
    %184 = vrot.lane.b32.xlu0 %v175, 4
    %v185 = vpop.permute.xlu0 %184
    %186 = vrot.lane.b32.xlu0 %v176, 4
    %v187 = vpop.permute.xlu0 %186
    %188 = vrot.lane.b32.xlu0 %v177, 4
    %v189 = vpop.permute.xlu0 %188
    %vm190 = vcmp.lt.s32.totalorder %v26, 4
    %v191 = vsel %vm190, %v187, %v189
    %v192 = vsel %vm190, %v185, %v187
    %v193 = vsel %vm190, %v183, %v185
    %v194 = vsel %vm190, %v189, %v183
    %195 = vrot.lane.b32.xlu0 %v174, 124
    %v196 = vpop.permute.xlu0 %195
    %197 = vrot.lane.b32.xlu0 %v175, 124
    %v198 = vpop.permute.xlu0 %197
    %199 = vrot.lane.b32.xlu0 %v176, 124
    %v200 = vpop.permute.xlu0 %199
    %201 = vrot.lane.b32.xlu0 %v177, 124
    %v202 = vpop.permute.xlu0 %201
    %vm203 = vcmp.lt.s32.totalorder %v26, 124
    %v204 = vsel %vm203, %v200, %v202
    %v205 = vsel %vm203, %v198, %v200
    %v206 = vsel %vm203, %v196, %v198
    %v207 = vsel %vm203, %v202, %v196
    %208 = vrot.lane.b32.xlu0 %v26, 4
    %v209 = vpop.permute.xlu0 %208
    %210 = vrot.lane.b32.xlu0 %v27, 4
    %v211 = vpop.permute.xlu0 %210
    %212 = vrot.lane.b32.xlu0 %v28, 4
    %v213 = vpop.permute.xlu0 %212
    %214 = vrot.lane.b32.xlu0 %v29, 4
    %v215 = vpop.permute.xlu0 %214
    %v216 = vsel %vm190, %v213, %v215
    %v217 = vsel %vm190, %v211, %v213
    %v218 = vsel %vm190, %v209, %v211
    %v219 = vsel %vm190, %v215, %v209
    %vm220 = vcmp.eq.s32.totalorder %v219, %v178
    %vm221 = vcmp.eq.s32.totalorder %v218, %v179
    %vm222 = vcmp.eq.s32.totalorder %v217, %v180
    %vm223 = vcmp.eq.s32.totalorder %v216, %v181
    %v224 = vsel %vm220, 1, 0
    %v225 = vsel %vm221, 1, 0
    %v226 = vsel %vm222, 1, 0
    %v227 = vsel %vm223, 1, 0
    %v228 = vperm.slane %v224, 0
    %v229 = vperm.slane %v225, 0
    %v230 = vperm.slane %v226, 0
    %v231 = vperm.slane %v227, 0
    %vm232 = vcmp.eq.s32.totalorder %v228, 1
    %vm233 = vcmp.eq.s32.totalorder %v229, 1
    %vm234 = vcmp.eq.s32.totalorder %v230, 1
    %vm235 = vcmp.eq.s32.totalorder %v231, 1
    %v236 = vsel %vm232, %v194, %v206
    %v237 = vsel %vm233, %v193, %v205
    %v238 = vsel %vm234, %v192, %v204
    %v239 = vsel %vm235, %v191, %v207
    %v240 = vxor.u32 %v26, 8
    %v241 = vxor.u32 %v27, 8
    %v242 = vxor.u32 %v28, 8
    %v243 = vxor.u32 %v29, 8
    %244 = vrot.lane.b32.xlu0 %v236, 8
    %v245 = vpop.permute.xlu0 %244
    %246 = vrot.lane.b32.xlu0 %v237, 8
    %v247 = vpop.permute.xlu0 %246
    %248 = vrot.lane.b32.xlu0 %v238, 8
    %v249 = vpop.permute.xlu0 %248
    %250 = vrot.lane.b32.xlu0 %v239, 8
    %v251 = vpop.permute.xlu0 %250
    %vm252 = vcmp.lt.s32.totalorder %v26, 8
    %v253 = vsel %vm252, %v249, %v251
    %v254 = vsel %vm252, %v247, %v249
    %v255 = vsel %vm252, %v245, %v247
    %v256 = vsel %vm252, %v251, %v245
    %257 = vrot.lane.b32.xlu0 %v236, 120
    %v258 = vpop.permute.xlu0 %257
    %259 = vrot.lane.b32.xlu0 %v237, 120
    %v260 = vpop.permute.xlu0 %259
    %261 = vrot.lane.b32.xlu0 %v238, 120
    %v262 = vpop.permute.xlu0 %261
    %263 = vrot.lane.b32.xlu0 %v239, 120
    %v264 = vpop.permute.xlu0 %263
    %vm265 = vcmp.lt.s32.totalorder %v26, 120
    %v266 = vsel %vm265, %v262, %v264
    %v267 = vsel %vm265, %v260, %v262
    %v268 = vsel %vm265, %v258, %v260
    %v269 = vsel %vm265, %v264, %v258
    %270 = vrot.lane.b32.xlu0 %v26, 8
    %v271 = vpop.permute.xlu0 %270
    %272 = vrot.lane.b32.xlu0 %v27, 8
    %v273 = vpop.permute.xlu0 %272
    %274 = vrot.lane.b32.xlu0 %v28, 8
    %v275 = vpop.permute.xlu0 %274
    %276 = vrot.lane.b32.xlu0 %v29, 8
    %v277 = vpop.permute.xlu0 %276
    %v278 = vsel %vm252, %v275, %v277
    %v279 = vsel %vm252, %v273, %v275
    %v280 = vsel %vm252, %v271, %v273
    %v281 = vsel %vm252, %v277, %v271
    %vm282 = vcmp.eq.s32.totalorder %v281, %v240
    %vm283 = vcmp.eq.s32.totalorder %v280, %v241
    %vm284 = vcmp.eq.s32.totalorder %v279, %v242
    %vm285 = vcmp.eq.s32.totalorder %v278, %v243
    %v286 = vsel %vm282, 1, 0
    %v287 = vsel %vm283, 1, 0
    %v288 = vsel %vm284, 1, 0
    %v289 = vsel %vm285, 1, 0
    %v290 = vperm.slane %v286, 0
    %v291 = vperm.slane %v287, 0
    %v292 = vperm.slane %v288, 0
    %v293 = vperm.slane %v289, 0
    %vm294 = vcmp.eq.s32.totalorder %v290, 1
    %vm295 = vcmp.eq.s32.totalorder %v291, 1
    %vm296 = vcmp.eq.s32.totalorder %v292, 1
    %vm297 = vcmp.eq.s32.totalorder %v293, 1
    %v298 = vsel %vm294, %v256, %v268
    %v299 = vsel %vm295, %v255, %v267
    %v300 = vsel %vm296, %v254, %v266
    %v301 = vsel %vm297, %v253, %v269
    %v306 = vrot.slane %v299, 4
    %v307 = vrot.slane %v301, 4
    %vm308 = vcmask 1043456
    %v309 = vsel %vm308, %v298, %v306
    %v310 = vsel %vm308, %v300, %v307
    %313 = vst [vmem:[#allocation5] sm:$0xff] %v309
    %314 = vst [vmem:[#allocation5 + $0x8] sm:$0xff] %v310
    // Predicated region
    $region10: #{tpu_custom_call.1} parent=1 // pred_check
      _
    $region11: #{tpu_custom_call.1} parent=1 // pred_check_branch
      %316 = sbr.rel (0) target = $region13
    $region12: #{tpu_custom_call.1} parent=1 // pred_region
      %318 = vsyncadd [#allocation4], 0
      %s320 = sshll.u32 [#allocation5], 4
      %s321 = int_to_ptr.vmem [resolvable:$true] %s320
      %s322 = sshll.u32 %s1, 4
      %s323 = int_to_ptr.hbm [resolvable:$true] %s322
      %325 = dma.vmem_to_hbm [thread:$0]  %s321, 256, %s323, [#allocation4]
    $region13: #{tpu_custom_call.1} parent=1 // pred_fallthru
      _
    // Predicated region
    $region14: #{tpu_custom_call.1} parent=1 // pred_check
      _
    $region15: #{tpu_custom_call.1} parent=1 // pred_check_branch
      %327 = sbr.rel (0) target = $region17
    $region16: #{tpu_custom_call.1} parent=1 // pred_region
      %329 = dma.done [#allocation4], 256
    $region17: #{tpu_custom_call.1} parent=1 // pred_fallthru
      _
    %330 = vsyncpa [#allocation3], 1
    %331 = vsyncpa [#allocation4], 1

</llo_original>
